<compile_context>
chip_gen: v7x
topology: tpu7x:2x2x1
jax: 0.10.0
libtpu: 0.0.40
codegen_flags: <defaults>
</compile_context>

<pallas_src>
import functools

import jax
import jax.numpy as jnp
from jax.experimental import pallas as pl
from jax.experimental.pallas import tpu as pltpu


def _round_up(x, m):
    return (x + m - 1) // m * m


def _ce_label_smooth_kernel(logits_ref, tgt_ref, out_ref, *,
                            epsilon, num_classes, num_valid_rows, block_rows):
    i = pl.program_id(0)

    # Init the resident scalar accumulator on the first grid step.
    @pl.when(i == 0)
    def _():
        out_ref[0, 0] = jnp.float32(0.0)

    # Load native-dtype tile and cast in-register (f32 math, incl. on v5e).
    x = logits_ref[...].astype(jnp.float32)                 # (TM, C)
    tm, c = x.shape

    # Per-row statistics (only (TM, 1) temporaries besides exp(x - m)).
    m = jnp.max(x, axis=1, keepdims=True)                   # (TM, 1)
    s = jnp.sum(jnp.exp(x - m), axis=1, keepdims=True)      # (TM, 1)
    lse = jnp.log(s) + m                                    # logsumexp  (TM, 1)
    rowsum = jnp.sum(x, axis=1, keepdims=True)              # (TM, 1)

    # Target logit via iota==target masked select-reduce (no one-hot tensor).
    class_ids = jax.lax.broadcasted_iota(jnp.int32, (tm, c), 1)
    tgt = tgt_ref[...]                                       # (TM, 1) int32
    x_t = jnp.sum(jnp.where(class_ids == tgt, x, 0.0),
                  axis=1, keepdims=True)                     # (TM, 1)

    # loss_row = -(1-eps)*log_prob[target] - (eps/C)*sum_c(log_prob)
    inv_c = jnp.float32(1.0 / num_classes)
    loss_row = (-(1.0 - epsilon) * (x_t - lse)
                - epsilon * (rowsum * inv_c - lse))          # (TM, 1)

    # Mask rows beyond the true batch size (wrapper pads N up to TM multiple).
    row_ids = i * block_rows + jax.lax.broadcasted_iota(jnp.int32, (tm, 1), 0)
    valid = row_ids < num_valid_rows
    tile_sum = jnp.sum(jnp.where(valid, loss_row, 0.0))

    out_ref[0, 0] = out_ref[0, 0] + tile_sum

    # Finalize: mean over the true batch.
    @pl.when(i == pl.num_programs(0) - 1)
    def _():
        out_ref[0, 0] = out_ref[0, 0] / jnp.float32(num_valid_rows)


def cross_entropy_label_smooth(logits, targets, *, epsilon,
                               max_block_rows=512,
                               tile_bytes_budget=4 << 20):
    """logits: (N, C) float (any float dtype, NOT upcast here);
    targets: (N,) int class indices.  Returns scalar f32 loss."""
    n, c = logits.shape
    itemsize = jnp.dtype(logits.dtype).itemsize

    # Row tile: as big as the per-buffer VMEM budget allows (amortize per-step
    # overhead), multiple of 8 (sublanes), capped, and no bigger than needed
    # for small N.  Class axis stays whole.
    tm_cap = max(8, tile_bytes_budget // max(1, c * itemsize))
    tm = min(int(max_block_rows), int(tm_cap), _round_up(n, 8))
    tm = max(8, (tm // 8) * 8)

    n_pad = _round_up(n, tm)
    if n_pad != n:
        logits = jnp.pad(logits, ((0, n_pad - n), (0, 0)))
        targets = jnp.pad(targets, (0, n_pad - n))
    tgt2d = targets.astype(jnp.int32).reshape(n_pad, 1)

    kernel = functools.partial(
        _ce_label_smooth_kernel,
        epsilon=float(epsilon),
        num_classes=int(c),
        num_valid_rows=int(n),
        block_rows=int(tm),
    )

    grid = (n_pad // tm,)
    bytes_accessed = (n_pad * c * itemsize    # logits stream
                      + n_pad * 4             # targets
                      + 4)                    # scalar out

    out = pl.pallas_call(
        kernel,
        out_shape=jax.ShapeDtypeStruct((1, 1), jnp.float32),
        grid=grid,
        in_specs=[
            pl.BlockSpec((tm, c), lambda i: (i, 0)),        # logits row tile
            pl.BlockSpec((tm, 1), lambda i: (i, 0)),        # target indices
        ],
        # Same block every step -> resident scalar accumulator in SMEM.
        out_specs=pl.BlockSpec((1, 1), lambda i: (0, 0),
                               memory_space=pltpu.SMEM),
        compiler_params=pltpu.CompilerParams(
            dimension_semantics=("arbitrary",),             # reduction axis
            # 2x double-buffered native tile (<=8 MiB) + f32 working copy +
            # targets fits easily; 32 MiB is safe on v5e/v6e/v7x.
            vmem_limit_bytes=32 << 20),
        cost_estimate=pl.CostEstimate(
            flops=6 * n_pad * c,
            transcendentals=n_pad * c,
            bytes_accessed=bytes_accessed),
    )(logits, tgt2d)
    return out[0, 0]


def _reference(logits, targets, epsilon):
    # Pure-JAX reference mirroring the PyTorch forward exactly.
    n, c = logits.shape
    log_probs = jax.nn.log_softmax(logits.astype(jnp.float32), axis=1)
    onehot = jax.nn.one_hot(targets, c, dtype=jnp.float32)
    smooth = (1.0 - epsilon) * onehot + epsilon / c
    return (-smooth * log_probs).mean(0).sum()


if __name__ == "__main__":
    EPS = 0.1
    key = jax.random.PRNGKey(0)

    # --- Test 1: toy shape consistent with the module (N=8, C=16), f32. ---
    N, C = 8, 16
    k_logits, k_tgt, key = jax.random.split(key, 3)
    logits = jax.random.normal(k_logits, (N, C), dtype=jnp.float32)
    targets = jax.random.randint(k_tgt, (N,), 0, C, dtype=jnp.int32)

    loss = jax.block_until_ready(
        cross_entropy_label_smooth(logits, targets, epsilon=EPS))
    ref = _reference(logits, targets, EPS)
    assert jnp.allclose(loss, ref, atol=1e-5, rtol=1e-5), (loss, ref)

    # --- Test 2: ragged N + native bf16 input (multi-row tile, masked tail). --
    N2, C2 = 300, 128
    k_logits2, k_tgt2, key = jax.random.split(key, 3)
    logits2 = jax.random.normal(k_logits2, (N2, C2), dtype=jnp.float32)
    logits2_bf16 = logits2.astype(jnp.bfloat16)          # fed to kernel as bf16
    targets2 = jax.random.randint(k_tgt2, (N2,), 0, C2, dtype=jnp.int32)

    loss2 = jax.block_until_ready(
        cross_entropy_label_smooth(logits2_bf16, targets2,
                                   epsilon=EPS, max_block_rows=128))
    ref2 = _reference(logits2_bf16, targets2, EPS)       # same bf16 values
    assert jnp.allclose(loss2, ref2, atol=1e-3, rtol=1e-3), (loss2, ref2)

    # --- Test 3: ImageNet-like class count (N=32, C=1000), multi-tile grid. --
    N3, C3 = 32, 1000
    k_logits3, k_tgt3, key = jax.random.split(key, 3)
    logits3 = jax.random.normal(k_logits3, (N3, C3), dtype=jnp.float32)
    targets3 = jax.random.randint(k_tgt3, (N3,), 0, C3, dtype=jnp.int32)

    loss3 = jax.block_until_ready(
        cross_entropy_label_smooth(logits3, targets3,
                                   epsilon=EPS, max_block_rows=16))
    ref3 = _reference(logits3, targets3, EPS)
    assert jnp.allclose(loss3, ref3, atol=1e-5, rtol=1e-5), (loss3, ref3)

    print("KERNEL_OK")
</pallas_src>

<mosaic_0001>
module attributes {stable_mosaic.version = 11 : i64} {
  func.func @_ce_label_smooth_kernel(%arg0: i32, %arg1: memref<8x16xf32, #tpu.memory_space<vmem>>, %arg2: memref<8x1xi32, #tpu.memory_space<vmem>>, %arg3: memref<1x1xf32, #tpu.memory_space<smem>>) attributes {dimension_semantics = [#tpu.dimension_semantics<arbitrary>], iteration_bounds = array<i64: 1>, scalar_prefetch = 0 : i64, scratch_operands = 0 : i64, tpu.core_type = #tpu.core_type<tc>, window_params = [{transform_indices = @transform_0, window_bounds = array<i64: 8, 16>}, {transform_indices = @transform_1, window_bounds = array<i64: 8, 1>}, {transform_indices = @transform_2, window_bounds = array<i64: 1, 1>}]} {
    %c0_i32 = arith.constant 0 : i32
    %0 = arith.cmpi eq, %arg0, %c0_i32 : i32
    %1 = arith.extui %0 : i1 to i32
    %c0_i32_0 = arith.constant 0 : i32
    %2 = arith.cmpi ne, %1, %c0_i32_0 : i32
    scf.if %2 {
      %cst_20 = arith.constant 0.000000e+00 : f32
      %c0_21 = arith.constant 0 : index
      %c0_22 = arith.constant 0 : index
      %50 = memref.load %arg3[%c0_21, %c0_22] : memref<1x1xf32, #tpu.memory_space<smem>>
      memref.store %cst_20, %arg3[%c0_21, %c0_22] : memref<1x1xf32, #tpu.memory_space<smem>>
    } else {
    }
    %c0 = arith.constant 0 : index
    %c0_1 = arith.constant 0 : index
    %3 = vector.load %arg1[%c0, %c0_1] : memref<8x16xf32, #tpu.memory_space<vmem>>, vector<8x16xf32>
    %cst = arith.constant dense<0xFF800000> : vector<8xf32>
    %4 = vector.multi_reduction <maximumf>, %3, %cst [1] : vector<8x16xf32> to vector<8xf32>
    %5 = vector.shape_cast %4 : vector<8xf32> to vector<8x1xf32>
    %6 = vector.broadcast %5 : vector<8x1xf32> to vector<8x16xf32>
    %7 = arith.subf %3, %6 : vector<8x16xf32>
    %8 = math.exp %7 : vector<8x16xf32>
    %cst_2 = arith.constant dense<0.000000e+00> : vector<8xf32>
    %9 = vector.multi_reduction <add>, %8, %cst_2 [1] : vector<8x16xf32> to vector<8xf32>
    %10 = vector.shape_cast %9 : vector<8xf32> to vector<8x1xf32>
    %11 = math.log %10 : vector<8x1xf32>
    %12 = arith.addf %11, %5 : vector<8x1xf32>
    %cst_3 = arith.constant dense<0.000000e+00> : vector<8xf32>
    %13 = vector.multi_reduction <add>, %3, %cst_3 [1] : vector<8x16xf32> to vector<8xf32>
    %14 = vector.shape_cast %13 : vector<8xf32> to vector<8x1xf32>
    %15 = tpu.iota {dimensions = array<i32: 1>} : vector<8x16xi32>
    %c0_4 = arith.constant 0 : index
    %c0_5 = arith.constant 0 : index
    %16 = vector.load %arg2[%c0_4, %c0_5] : memref<8x1xi32, #tpu.memory_space<vmem>>, vector<8x1xi32>
    %17 = vector.broadcast %16 : vector<8x1xi32> to vector<8x16xi32>
    %18 = arith.cmpi eq, %15, %17 : vector<8x16xi32>
    %cst_6 = arith.constant 0.000000e+00 : f32
    %19 = vector.broadcast %cst_6 : f32 to vector<8x16xf32>
    %20 = arith.select %18, %3, %19 : vector<8x16xi1>, vector<8x16xf32>
    %cst_7 = arith.constant dense<0.000000e+00> : vector<8xf32>
    %21 = vector.multi_reduction <add>, %20, %cst_7 [1] : vector<8x16xf32> to vector<8xf32>
    %22 = vector.shape_cast %21 : vector<8xf32> to vector<8x1xf32>
    %23 = arith.subf %22, %12 : vector<8x1xf32>
    %cst_8 = arith.constant -0.899999976 : f32
    %24 = vector.broadcast %cst_8 : f32 to vector<8x1xf32>
    %25 = arith.mulf %24, %23 : vector<8x1xf32>
    %cst_9 = arith.constant 6.250000e-02 : f32
    %26 = vector.broadcast %cst_9 : f32 to vector<8x1xf32>
    %27 = arith.mulf %14, %26 : vector<8x1xf32>
    %28 = arith.subf %27, %12 : vector<8x1xf32>
    %cst_10 = arith.constant 1.000000e-01 : f32
    %29 = vector.broadcast %cst_10 : f32 to vector<8x1xf32>
    %30 = arith.mulf %29, %28 : vector<8x1xf32>
    %31 = arith.subf %25, %30 : vector<8x1xf32>
    %c8_i32 = arith.constant 8 : i32
    %32 = arith.muli %arg0, %c8_i32 : i32
    %33 = tpu.iota {dimensions = array<i32: 0>} : vector<8x1xi32>
    %34 = vector.broadcast %32 : i32 to vector<8x1xi32>
    %35 = arith.addi %34, %33 : vector<8x1xi32>
    %c8_i32_11 = arith.constant 8 : i32
    %36 = vector.broadcast %c8_i32_11 : i32 to vector<8x1xi32>
    %37 = arith.cmpi slt, %35, %36 : vector<8x1xi32>
    %cst_12 = arith.constant 0.000000e+00 : f32
    %38 = vector.broadcast %cst_12 : f32 to vector<8x1xf32>
    %39 = arith.select %37, %31, %38 : vector<8x1xi1>, vector<8x1xf32>
    %40 = vector.shape_cast %39 : vector<8x1xf32> to vector<1x8x1xf32>
    %cst_13 = arith.constant dense<0.000000e+00> : vector<1xf32>
    %41 = vector.multi_reduction <add>, %40, %cst_13 [1, 2] : vector<1x8x1xf32> to vector<1xf32>
    %42 = vector.shape_cast %41 : vector<1xf32> to vector<1x1x1xf32>
    %43 = vector.extract %42[0, 0, 0] : f32 from vector<1x1x1xf32>
    %c0_14 = arith.constant 0 : index
    %c0_15 = arith.constant 0 : index
    %44 = memref.load %arg3[%c0_14, %c0_15] : memref<1x1xf32, #tpu.memory_space<smem>>
    %45 = arith.addf %44, %43 : f32
    %c0_16 = arith.constant 0 : index
    %c0_17 = arith.constant 0 : index
    %46 = memref.load %arg3[%c0_16, %c0_17] : memref<1x1xf32, #tpu.memory_space<smem>>
    memref.store %45, %arg3[%c0_16, %c0_17] : memref<1x1xf32, #tpu.memory_space<smem>>
    %c0_i32_18 = arith.constant 0 : i32
    %47 = arith.cmpi eq, %arg0, %c0_i32_18 : i32
    %48 = arith.extui %47 : i1 to i32
    %c0_i32_19 = arith.constant 0 : i32
    %49 = arith.cmpi ne, %48, %c0_i32_19 : i32
    scf.if %49 {
      %c0_20 = arith.constant 0 : index
      %c0_21 = arith.constant 0 : index
      %50 = memref.load %arg3[%c0_20, %c0_21] : memref<1x1xf32, #tpu.memory_space<smem>>
      %cst_22 = arith.constant 8.000000e+00 : f32
      %51 = arith.divf %50, %cst_22 : f32
      %c0_23 = arith.constant 0 : index
      %c0_24 = arith.constant 0 : index
      %52 = memref.load %arg3[%c0_23, %c0_24] : memref<1x1xf32, #tpu.memory_space<smem>>
      memref.store %51, %arg3[%c0_23, %c0_24] : memref<1x1xf32, #tpu.memory_space<smem>>
    } else {
    }
    return
  }
  func.func @transform_0(%arg0: i32) -> (i32, i32) {
    %c0_i32 = arith.constant 0 : i32
    %c0_i32_0 = arith.constant 0 : i32
    return %arg0, %c0_i32 : i32, i32
  }
  func.func @transform_1(%arg0: i32) -> (i32, i32) {
    %c0_i32 = arith.constant 0 : i32
    %c0_i32_0 = arith.constant 0 : i32
    return %arg0, %c0_i32 : i32, i32
  }
  func.func @transform_2(%arg0: i32) -> (i32, i32) {
    %c0_i32 = arith.constant 0 : i32
    %c0_i32_0 = arith.constant 0 : i32
    %c0_i32_1 = arith.constant 0 : i32
    return %c0_i32, %c0_i32_0 : i32, i32
  }
}

</mosaic_0001>

<llo_original>
// kernel: tpu_custom_call.1
$region0: #{tpu_custom_call.1}
  #allocation0 [shape = 'u32[]', space=smem, size = 0x4, offset = 0x4, fixed_abs, tag = 'smem constant byte address 0x4 - core index']
  #allocation1 [shape = 'u32[144,128]{1,0:T(1,128)}', space=vmem, size = 0x12000, scoped, tag = 'internal scratch']
  %s0 = inlined_call_operand.vmem [shape: f32[8,16], index: 0, kind: input, shape index: {}]
  %s1 = inlined_call_operand.vmem [shape: s32[8,1], index: 1, kind: input, shape index: {}]
  %s2 = inlined_call_operand.hbm [shape: f32[1,1], index: 2, kind: output, shape index: {}]
  %s3 = sld [smem:[#allocation0]]
  $region26: #{tpu_custom_call.1} parent=0
    _
  %s5 = ssub.s32 1, %s3
  %s6 = scalar_select 0, %s5, %s3
  $region1: #{tpu_custom_call.1} parent=0
    #allocation2 [shape = 'u8[512]{0}', space=smem, size = 0x200, scoped, tag = 'output window, operand 0, single buffered']
    #allocation3 [shape = 's32[1]{0}', space=sflag, size = 0x4, scoped, tag = 'scoped memory for tpu_custom_call.1']
    %7 = vsyncpa [#allocation3], 0
    // Predicated region
    $region2: #{tpu_custom_call.1} parent=1 // pred_check
      _
    $region3: #{tpu_custom_call.1} parent=1 // pred_check_branch
      %9 = sbr.rel (0) target = $region5
    $region4: #{tpu_custom_call.1} parent=1 // pred_region
      _
    $region5: #{tpu_custom_call.1} parent=1 // pred_fallthru
      _
    // Predicated region
    $region6: #{tpu_custom_call.1} parent=1 // pred_check
      _
    $region7: #{tpu_custom_call.1} parent=1 // pred_check_branch
      %11 = sbr.rel (0) target = $region9
    $region8: #{tpu_custom_call.1} parent=1 // pred_region
      _
    $region9: #{tpu_custom_call.1} parent=1 // pred_fallthru
      _
    %p12 = scmp.eq.s32.totalorder 0, 0
    // Predicated region
    $region10: #{tpu_custom_call.1} parent=1 // pred_check
      %p13 = pneg %p12
    $region11: #{tpu_custom_call.1} parent=1 // pred_check_branch
      %15 = sbr.rel (%p13) target = $region13
    $region12: #{tpu_custom_call.1} parent=1 // pred_region
      %s16 = scalar_lea.smem [#allocation2], 0
      %17 = sst [smem:[%s16]] 0.0
    $region13: #{tpu_custom_call.1} parent=1 // pred_fallthru
      _
    %v18 = vld [vmem:[%s0] sm:$0xff]
    %vm19 = vcmask 130048
    %v20 = vsel %vm19, %v18, -inf
    %21 = vmax.xlane.f32.xlu0 %v20
    %v22 = vpop.xlane.xlu0 %21
    %v23 = vsub.f32 %v18, %v22
    %v24 = vmul.f32 %v23, 1.442695
    %v25 = vpow.pop %v24
    %v26 = vsel %vm19, %v25, 0.0
    %27 = vadd.xlane.f32.xlu0 %v26
    %v28 = vpop.xlane.xlu0 %27
    %v29 = vlog2.pop %v28
    %v30 = vmul.f32 %v29, 0.6931472
    %v31 = vadd.f32 %v30, %v22
    %v32 = vsel %vm19, %v18, 0.0
    %33 = vadd.xlane.f32.xlu0 %v32
    %v34 = vpop.xlane.xlu0 %33
    %v35 = vlaneseq
    %v36 = vand.u32 %v35, 127
    %v37 = vld [vmem:[%s1] sm:$0xff]
    %38 = vset.pattern.permute.xlu0 0
    %39 = vperm.xlu0 %38, %v37
    %v40 = vpop.permute.xlu0 %39
    %vm41 = vcmp.eq.s32.totalorder %v36, %v40
    %v42 = vsel %vm41, %v18, 0.0
    %v43 = vsel %vm19, %v42, 0.0
    %44 = vadd.xlane.f32.xlu0 %v43
    %v45 = vpop.xlane.xlu0 %44
    %v46 = vsub.f32 %v45, %v31
    %v47 = vmul.f32 %v46, -0.9
    %v48 = vmul.f32 %v34, 0.0625
    %v49 = vsub.f32 %v48, %v31
    %v50 = vmul.f32 %v49, 0.1
    %v51 = vsub.f32 %v47, %v50
    %s52 = smul.u32 0, 8
    %v53 = vlaneseq
    %v54 = vshrl.u32 %v53, 7
    %v55 = vstv %s52
    %v56 = vadd.s32 %v55, %v54
    %vm57 = vcmp.lt.s32.totalorder %v56, 8
    %v58 = vsel %vm57, %v51, 0.0
    %vm59 = vcmask 7168
    %v60 = vsel %vm59, %v58, 0.0
    %61 = vadd.xlane.f32.xlu0 %v60
    %v62 = vpop.xlane.xlu0 %61
    %v63 = vrot.slane %v62, 4
    %v64 = vadd.f32 %v62, %v63
    %v65 = vrot.slane %v64, 2
    %v66 = vadd.f32 %v64, %v65
    %v67 = vrot.slane %v66, 1
    %v68 = vadd.f32 %v66, %v67
    %s69 = vtos %v68
    %s70 = sld [smem:[#allocation2]]
    %s71 = sadd.f32 %s70, %s69
    %s72 = scalar_lea.smem [#allocation2], 0
    %73 = sst [smem:[%s72]] %s71
    // Predicated region
    $region14: #{tpu_custom_call.1} parent=1 // pred_check
      %p74 = pneg %p12
    $region15: #{tpu_custom_call.1} parent=1 // pred_check_branch
      %76 = sbr.rel (%p74) target = $region17
    $region16: #{tpu_custom_call.1} parent=1 // pred_region
      %s77 = sld [smem:[#allocation2]]
      %v78 = vrcp.pop 8.0
      %s79 = vtos %v78
      %s80 = smul.f32 %s77, %s79
      %81 = sst [smem:[%s72]] %s80
    $region17: #{tpu_custom_call.1} parent=1 // pred_fallthru
      _
    // Predicated region
    $region18: #{tpu_custom_call.1} parent=1 // pred_check
      _
    $region19: #{tpu_custom_call.1} parent=1 // pred_check_branch
      %83 = sbr.rel (0) target = $region21
    $region20: #{tpu_custom_call.1} parent=1 // pred_region
      %s85 = ssub.s32 16, 16
      %86 = vsyncadd [#allocation3], %s85
      %89 = dma.smem_to_hbm [#allocation2], 16, %s2, [#allocation3]
    $region21: #{tpu_custom_call.1} parent=1 // pred_fallthru
      _
    // Predicated region
    $region22: #{tpu_custom_call.1} parent=1 // pred_check
      _
    $region23: #{tpu_custom_call.1} parent=1 // pred_check_branch
      %91 = sbr.rel (0) target = $region25
    $region24: #{tpu_custom_call.1} parent=1 // pred_region
      %92 = dma.done [#allocation3], 16
    $region25: #{tpu_custom_call.1} parent=1 // pred_fallthru
      _
    %93 = sfence
    %94 = vsyncpa [#allocation3], 1

</llo_original>
